<compile_context>
chip_gen: v5e
topology: v5e:2x2
jax: 0.10.0
libtpu: 0.0.40
codegen_flags: <defaults>
</compile_context>

<pallas_src>
import functools

import jax
import jax.numpy as jnp
import math
from jax.experimental import pallas as pl
from jax.experimental.pallas import tpu as pltpu


# ---------------------------------------------------------------------------
# Kernels (work for both 2-D folded and 3-D blocks via jnp broadcasting)
# ---------------------------------------------------------------------------
def _pos_enc_kernel(x_ref, pe_ref, o_ref):
    x = x_ref[...].astype(jnp.float32)
    p = pe_ref[...].astype(jnp.float32)
    o_ref[...] = (x + p).astype(o_ref.dtype)


def _pos_enc_dropout_kernel(x_ref, pe_ref, rnd_ref, o_ref, *,
                            keep_threshold, inv_keep_prob):
    # Fused: out = where(rnd < threshold, (x + pe) / keep_prob, 0)
    x = x_ref[...].astype(jnp.float32)
    p = pe_ref[...].astype(jnp.float32)
    y = x + p
    keep = rnd_ref[...] < jnp.int32(keep_threshold)       # integer threshold compare
    o_ref[...] = jnp.where(keep, y * inv_keep_prob, 0.0).astype(o_ref.dtype)


# ---------------------------------------------------------------------------
# Parameter construction (deterministic, mirrors the PyTorch __init__)
# ---------------------------------------------------------------------------
def make_positional_encoding_table(emb_dim, max_seq_len=200, dtype=jnp.float32):
    assert emb_dim % 2 == 0, "emb_dim must be even (as in the PyTorch module)"
    position = jnp.arange(0, max_seq_len, dtype=jnp.float32)[:, None]          # (L, 1)
    div_term = jnp.exp(
        jnp.arange(0, emb_dim, 2, dtype=jnp.float32) * (-math.log(10000.0) / emb_dim)
    )                                                                            # (E/2,)
    ang = position * div_term                                                    # (L, E/2)
    # interleave: pe[:, 0::2] = sin, pe[:, 1::2] = cos
    pe = jnp.stack([jnp.sin(ang), jnp.cos(ang)], axis=-1).reshape(max_seq_len, emb_dim)
    # matches torch: pe.unsqueeze(0).transpose(0, 1) -> (max_seq_len, 1, emb_dim)
    return pe[:, None, :].astype(dtype)


# ---------------------------------------------------------------------------
# Tiling helper: rows per block, aiming at ~target_bytes per VMEM buffer
# ---------------------------------------------------------------------------
def _choose_row_tile(num_rows, row_bytes, target_bytes=1 << 20):
    if num_rows * row_bytes <= target_bytes:
        return num_rows                      # whole array fits one block (always legal)
    t = max(1, target_bytes // row_bytes)
    t = max(8, (t // 8) * 8)                 # multiple of 8 sublanes
    return min(t, num_rows)


# ---------------------------------------------------------------------------
# Wrapper
# ---------------------------------------------------------------------------
def positional_encoding(x, pe, *, dropout_p=0.1, training=False, rng_key=None,
                        donate_x=False):
    """x: (S, B, E); pe: (max_seq_len, 1, E). Returns dropout(x + pe[:S])."""
    S, B, E = x.shape
    L = pe.shape[0]
    if S > L:
        raise ValueError(f"seq_len {S} exceeds max_seq_len {L}")
    if not (0.0 <= float(dropout_p) < 1.0):
        raise ValueError("dropout_p must be in [0, 1)")

    dense_3d = (E % 128 == 0) and (B % 8 == 0)

    if dense_3d:
        # Natural layout already lane/sublane dense; pe read is only 1/B of x,
        # and the BlockSpec index_map reads rows straight out of the full table
        # (no per-call pe[:S] slice copy).
        x_in = x
        pe_in = pe                                                   # (L, 1, E)
        row_bytes = B * E * 4
        tS = _choose_row_tile(S, row_bytes)
        grid = (pl.cdiv(S, tS),)
        data_spec = pl.BlockSpec((tS, B, E), lambda i: (i, 0, 0))
        pe_spec = pl.BlockSpec((tS, 1, E), lambda i: (i, 0, 0))
        rnd_shape = (S, B, E)
        out_shape_2 = (S, B, E)
    else:
        # Fold batch into lanes so stores are lane-dense even when E < 128 / B < 8.
        BE = B * E
        x_in = x.reshape(S, BE)                                      # free reshape
        # pe broadcast over batch along lanes; wrapper glue (XLA-fused), small (S rows).
        pe_in = jnp.tile(pe[:S, 0, :], (1, B))                       # (S, B*E)
        row_bytes = BE * 4
        tS = _choose_row_tile(S, row_bytes)
        grid = (pl.cdiv(S, tS),)
        data_spec = pl.BlockSpec((tS, BE), lambda i: (i, 0))
        pe_spec = pl.BlockSpec((tS, BE), lambda i: (i, 0))
        rnd_shape = (S, BE)
        out_shape_2 = (S, BE)

    compiler_params = pltpu.CompilerParams(
        dimension_semantics=("parallel",),          # shard seq axis across TCs on v7x
        vmem_limit_bytes=32 * 1024 * 1024,          # headroom on all generations
    )

    use_dropout = bool(training) and float(dropout_p) > 0.0
    if use_dropout:
        # TODO(synk): PyTorch's dropout RNG stream cannot be reproduced bit-exactly;
        # we draw int32 uniforms with jax.random and do an integer-threshold compare
        # fused into the kernel (TPU hw PRNG is avoided: it doesn't lower in interpret).
        if rng_key is None:
            rng_key = jax.random.PRNGKey(0)
        keep_prob = 1.0 - float(dropout_p)
        imax = int(jnp.iinfo(jnp.int32).max)
        rnd = jax.random.randint(rng_key, rnd_shape, minval=0, maxval=imax,
                                 dtype=jnp.int32)
        keep_threshold = int(round(keep_prob * imax))
        kernel = functools.partial(
            _pos_enc_dropout_kernel,
            keep_threshold=keep_threshold,
            inv_keep_prob=float(1.0 / keep_prob),
        )
        in_specs = [data_spec, pe_spec, data_spec]
        operands = (x_in, pe_in, rnd)
    else:
        kernel = _pos_enc_kernel
        in_specs = [data_spec, pe_spec]
        operands = (x_in, pe_in)

    io_aliases = {0: 0} if donate_x else {}

    out2 = pl.pallas_call(
        kernel,
        out_shape=jax.ShapeDtypeStruct(out_shape_2, x.dtype),
        grid=grid,
        in_specs=in_specs,
        out_specs=data_spec,
        compiler_params=compiler_params,
        input_output_aliases=io_aliases,
    )(*operands)

    return out2.reshape(S, B, E)


# ---------------------------------------------------------------------------
# Main
# ---------------------------------------------------------------------------
if __name__ == "__main__":
    seq_len, batch, emb_dim = 8, 2, 32
    max_seq_len = 200
    dropout_p = 0.1

    key = jax.random.PRNGKey(0)
    x = jax.random.normal(key, (seq_len, batch, emb_dim), dtype=jnp.float32)
    pe = make_positional_encoding_table(emb_dim, max_seq_len)

    # --- Eval mode (dropout = identity): must match x + pe[:S] exactly. ----------
    out_eval = positional_encoding(x, pe, dropout_p=dropout_p, training=False)
    out_eval = jax.block_until_ready(out_eval)
    ref = x + pe[:seq_len]
    assert out_eval.shape == x.shape
    assert jnp.allclose(out_eval, ref, atol=1e-6), "eval-mode mismatch"

    # --- Training mode: fused inverted dropout. ----------------------------------
    out_train = positional_encoding(
        x, pe, dropout_p=dropout_p, training=True, rng_key=jax.random.PRNGKey(1234)
    )
    out_train = jax.block_until_ready(out_train)
    assert out_train.shape == x.shape
    keep_prob = 1.0 - dropout_p
    kept = out_train != 0.0
    # Kept elements equal (x + pe) / keep_prob; the rest are exactly zero.
    assert jnp.allclose(
        jnp.where(kept, out_train, 0.0),
        jnp.where(kept, ref / keep_prob, 0.0),
        atol=1e-5, rtol=1e-5,
    ), "training-mode kept-values mismatch"
    drop_frac = 1.0 - jnp.mean(kept.astype(jnp.float32))
    assert 0.0 < float(drop_frac) < 0.5, "dropout fraction implausible"

    # --- Also exercise the dense 3-D path (E % 128 == 0, B % 8 == 0). ------------
    x_big = jax.random.normal(jax.random.PRNGKey(2), (16, 8, 128), dtype=jnp.float32)
    pe_big = make_positional_encoding_table(128, max_seq_len)
    out_big = positional_encoding(x_big, pe_big, dropout_p=dropout_p, training=False)
    out_big = jax.block_until_ready(out_big)
    assert jnp.allclose(out_big, x_big + pe_big[:16], atol=1e-6), "3-D path mismatch"

    print("KERNEL_OK")
</pallas_src>

<mosaic_0001>
module attributes {stable_mosaic.version = 11 : i64} {
  func.func @_pos_enc_kernel(%arg0: i32, %arg1: memref<8x64xf32, #tpu.memory_space<vmem>>, %arg2: memref<8x64xf32, #tpu.memory_space<vmem>>, %arg3: memref<8x64xf32, #tpu.memory_space<vmem>>) attributes {dimension_semantics = [#tpu.dimension_semantics<parallel>], iteration_bounds = array<i64: 1>, scalar_prefetch = 0 : i64, scratch_operands = 0 : i64, tpu.core_type = #tpu.core_type<tc>, window_params = [{transform_indices = @transform_0, window_bounds = array<i64: 8, 64>}, {transform_indices = @transform_1, window_bounds = array<i64: 8, 64>}, {transform_indices = @transform_2, window_bounds = array<i64: 8, 64>}]} {
    %c0 = arith.constant 0 : index
    %c0_0 = arith.constant 0 : index
    %0 = vector.load %arg1[%c0, %c0_0] : memref<8x64xf32, #tpu.memory_space<vmem>>, vector<8x64xf32>
    %c0_1 = arith.constant 0 : index
    %c0_2 = arith.constant 0 : index
    %1 = vector.load %arg2[%c0_1, %c0_2] : memref<8x64xf32, #tpu.memory_space<vmem>>, vector<8x64xf32>
    %2 = arith.addf %0, %1 : vector<8x64xf32>
    %c0_3 = arith.constant 0 : index
    %c0_4 = arith.constant 0 : index
    %3 = vector.load %arg3[%c0_3, %c0_4] : memref<8x64xf32, #tpu.memory_space<vmem>>, vector<8x64xf32>
    tpu.vector_store %arg3[%c0_3, %c0_4], %2 {strides = array<i32>} : memref<8x64xf32, #tpu.memory_space<vmem>>, vector<8x64xf32>,
    return
  }
  func.func @transform_0(%arg0: i32) -> (i32, i32) {
    %c0_i32 = arith.constant 0 : i32
    %c0_i32_0 = arith.constant 0 : i32
    return %arg0, %c0_i32 : i32, i32
  }
  func.func @transform_1(%arg0: i32) -> (i32, i32) {
    %c0_i32 = arith.constant 0 : i32
    %c0_i32_0 = arith.constant 0 : i32
    return %arg0, %c0_i32 : i32, i32
  }
  func.func @transform_2(%arg0: i32) -> (i32, i32) {
    %c0_i32 = arith.constant 0 : i32
    %c0_i32_0 = arith.constant 0 : i32
    return %arg0, %c0_i32 : i32, i32
  }
}

</mosaic_0001>

<llo_original>
// kernel: tpu_custom_call.1
$region0: #{tpu_custom_call.1}
  #allocation0 [shape = 'u32[]', space=smem, size = 0x4, offset = 0x4, fixed_abs, tag = 'smem constant byte address 0x4 - core index']
  #allocation1 [shape = 'u32[72,128]{1,0:T(1,128)}', space=vmem, size = 0x9000, scoped, tag = 'internal scratch']
  %s0 = inlined_call_operand.hbm [shape: f32[8,64], index: 0, kind: input, shape index: {}]
  %s1 = inlined_call_operand.hbm [shape: f32[8,64], index: 1, kind: input, shape index: {}]
  %s2 = inlined_call_operand.hbm [shape: f32[8,64], index: 2, kind: output, shape index: {}]
  %s3 = sld [smem:[#allocation0]]
  $region26: #{tpu_custom_call.1} parent=0
    _
  %s5 = ssub.s32 1, %s3
  %s6 = scalar_select 0, %s5, %s3
  $region1: #{tpu_custom_call.1} parent=0
    #allocation2 [shape = 'u8[4096]{0}', space=vmem, size = 0x1000, scoped, tag = 'input window, operand 0, single buffered']
    #allocation3 [shape = 's32[1]{0}', space=sflag, size = 0x4, scoped, tag = 'scoped memory for tpu_custom_call.1']
    #allocation4 [shape = 's32[1]{0}', space=sflag, size = 0x4, scoped, tag = 'scoped memory for tpu_custom_call.1']
    #allocation5 [shape = 'u8[4096]{0}', space=vmem, size = 0x1000, scoped, tag = 'input window, operand 1, single buffered']
    #allocation6 [shape = 's32[1]{0}', space=sflag, size = 0x4, scoped, tag = 'scoped memory for tpu_custom_call.1']
    #allocation7 [shape = 'u8[4096]{0}', space=vmem, size = 0x1000, scoped, tag = 'output window, operand 0, single buffered']
    %7 = vsyncpa [#allocation3], 0
    %8 = vsyncpa [#allocation6], 0
    %9 = vsyncpa [#allocation4], 0
    // Predicated region
    $region2: #{tpu_custom_call.1} parent=1 // pred_check
      _
    $region3: #{tpu_custom_call.1} parent=1 // pred_check_branch
      %11 = sbr.rel (0) target = $region5
    $region4: #{tpu_custom_call.1} parent=1 // pred_region
      %13 = vsyncadd [#allocation3], 0
      %s15 = sshll.u32 %s0, 4
      %s16 = int_to_ptr.hbm [resolvable:$true] %s15
      %s17 = sshll.u32 [#allocation2], 4
      %s18 = int_to_ptr.vmem [resolvable:$true] %s17
      %20 = dma.hbm_to_vmem [thread:$0]  %s16, 128, %s18, [#allocation3]
    $region5: #{tpu_custom_call.1} parent=1 // pred_fallthru
      _
    // Predicated region
    $region6: #{tpu_custom_call.1} parent=1 // pred_check
      _
    $region7: #{tpu_custom_call.1} parent=1 // pred_check_branch
      %22 = sbr.rel (0) target = $region9
    $region8: #{tpu_custom_call.1} parent=1 // pred_region
      %24 = vsyncadd [#allocation6], 0
      %s26 = sshll.u32 %s1, 4
      %s27 = int_to_ptr.hbm [resolvable:$true] %s26
      %s28 = sshll.u32 [#allocation5], 4
      %s29 = int_to_ptr.vmem [resolvable:$true] %s28
      %31 = dma.hbm_to_vmem [thread:$0]  %s27, 128, %s29, [#allocation6]
    $region9: #{tpu_custom_call.1} parent=1 // pred_fallthru
      _
    // Predicated region
    $region10: #{tpu_custom_call.1} parent=1 // pred_check
      _
    $region11: #{tpu_custom_call.1} parent=1 // pred_check_branch
      %33 = sbr.rel (0) target = $region13
    $region12: #{tpu_custom_call.1} parent=1 // pred_region
      %35 = dma.done [#allocation3], 128
    $region13: #{tpu_custom_call.1} parent=1 // pred_fallthru
      _
    // Predicated region
    $region14: #{tpu_custom_call.1} parent=1 // pred_check
      _
    $region15: #{tpu_custom_call.1} parent=1 // pred_check_branch
      %37 = sbr.rel (0) target = $region17
    $region16: #{tpu_custom_call.1} parent=1 // pred_region
      %39 = dma.done [#allocation6], 128
    $region17: #{tpu_custom_call.1} parent=1 // pred_fallthru
      _
    %v40 = vld [vmem:[#allocation2] sm:$0xff]
    %v41 = vld [vmem:[#allocation5] sm:$0xff]
    %v42 = vadd.f32 %v40, %v41
    %vm43 = vcmask 523264
    %44 = vst.msk [vmem:[#allocation7] sm:$0xff] %vm43, %v42
    // Predicated region
    $region18: #{tpu_custom_call.1} parent=1 // pred_check
      _
    $region19: #{tpu_custom_call.1} parent=1 // pred_check_branch
      %46 = sbr.rel (0) target = $region21
    $region20: #{tpu_custom_call.1} parent=1 // pred_region
      %48 = vsyncadd [#allocation4], 0
      %s50 = sshll.u32 [#allocation7], 4
      %s51 = int_to_ptr.vmem [resolvable:$true] %s50
      %s52 = sshll.u32 %s2, 4
      %s53 = int_to_ptr.hbm [resolvable:$true] %s52
      %55 = dma.vmem_to_hbm [thread:$0]  %s51, 128, %s53, [#allocation4]
    $region21: #{tpu_custom_call.1} parent=1 // pred_fallthru
      _
    // Predicated region
    $region22: #{tpu_custom_call.1} parent=1 // pred_check
      _
    $region23: #{tpu_custom_call.1} parent=1 // pred_check_branch
      %57 = sbr.rel (0) target = $region25
    $region24: #{tpu_custom_call.1} parent=1 // pred_region
      %59 = dma.done [#allocation4], 128
    $region25: #{tpu_custom_call.1} parent=1 // pred_fallthru
      _
    %60 = vsyncpa [#allocation3], 1
    %61 = vsyncpa [#allocation6], 1
    %62 = vsyncpa [#allocation4], 1

</llo_original>
